<compile_context>
chip_gen: v7x
topology: tpu7x:2x2x1
jax: 0.10.0
libtpu: 0.0.40
codegen_flags: <defaults>
</compile_context>

<pallas_src>
import functools

import numpy as np
import jax
import jax.numpy as jnp
from jax.experimental import pallas as pl
from jax.experimental.pallas import tpu as pltpu

BN_EPS = 1e-5
NEG_SLOPE = 0.01
# Working sets are << 1 MiB; 32 MiB is safely portable to v5e/v6e (128 MiB)
# and v7x (64 MiB physical).
VMEM_LIMIT = 32 * 1024 * 1024


# -----------------------------------------------------------------------------
# Pass A: conv as KH lane-dense matmuls + per-batch partial BN statistics.
#   x_ref   : (1, Hp, Wp*Cin)          bf16
#   w_ref   : (KH, Wp*Cin, W*Cout)     bf16  (structured: W-taps folded in)
#   conv_ref: (1, H, W*Cout)           bf16  (lane-dense, 128 lanes)
#   sum_ref : (1, 1, W*Cout)           f32   (per-column partial sums)
#   sq_ref  : (1, 1, W*Cout)           f32   (per-column partial sum of sq)
# -----------------------------------------------------------------------------
def conv_stats_kernel(x_ref, w_ref, conv_ref, sum_ref, sq_ref, *, kh, h):
    # KH small dots, f32 accumulation on the MXU; bf16 operands go in directly
    # (no up/down cast churn), elementwise math below stays f32.
    acc = jnp.dot(x_ref[0, 0:h, :], w_ref[0],
                  preferred_element_type=jnp.float32)          # (H, W*Cout) f32
    for dh in range(1, kh):
        acc = acc + jnp.dot(x_ref[0, dh:dh + h, :], w_ref[dh],
                            preferred_element_type=jnp.float32)

    conv_ref[0] = acc.astype(conv_ref.dtype)                   # lane-dense store
    # Per-(w, c) column partial stats; the per-channel fold over W and over the
    # batch happens in the (tiny) JAX glue between the two passes.
    sum_ref[0] = jnp.sum(acc, axis=0, keepdims=True)           # (1, W*Cout)
    sq_ref[0] = jnp.sum(acc * acc, axis=0, keepdims=True)      # (1, W*Cout)


# -----------------------------------------------------------------------------
# Pass B: fused BN affine (one FMA) + leaky_relu + avg_pool2d(kernel=(1, 2)).
#   conv_ref : (1, H, W*Cout)   bf16
#   scale/shift_ref : (1, W*Cout) f32   (per-channel values tiled over W)
#   pool_ref : (W*Cout, Wo*Cout) f32    (constant 0.5-pair pooling matrix)
#   o_ref    : (1, H, Wo*Cout)  f32
# -----------------------------------------------------------------------------
def bn_pool_kernel(conv_ref, scale_ref, shift_ref, pool_ref, o_ref, *,
                   neg_slope):
    y = conv_ref[0].astype(jnp.float32) * scale_ref[...] + shift_ref[...]
    y = jnp.where(y >= 0, y, neg_slope * y)                    # leaky_relu(0.01)
    # (1, 2) average pool of adjacent Cout-groups along the lane axis, done as
    # one small matmul so the lane layout never has to be split in-kernel.
    o_ref[0] = jnp.dot(y, pool_ref[...], preferred_element_type=jnp.float32)


def _build_structured_weights(w_oihw, W, Wp):
    """(Cout, Cin, KH, KW) -> (KH, Wp*Cin, W*Cout) bf16 conv-as-matmul matrix.

    W2[dh, (w+dw)*Cin + ci, w*Cout + co] = w_oihw[co, ci, dh, dw]
    so that  out[h, w*Cout+co] = sum_dh x_pad[h+dh, :] @ W2[dh].
    """
    Cout, Cin, KH, KW = w_oihw.shape
    wt = jnp.transpose(w_oihw, (2, 3, 1, 0))                   # (KH, KW, Cin, Cout)
    dh_i, dw_i, ci_i, co_i, w_i = np.meshgrid(
        np.arange(KH), np.arange(KW), np.arange(Cin), np.arange(Cout),
        np.arange(W), indexing="ij")
    rows = (w_i + dw_i) * Cin + ci_i
    cols = w_i * Cout + co_i
    vals = jnp.broadcast_to(wt[..., None], dh_i.shape)
    w2 = jnp.zeros((KH, Wp * Cin, W * Cout), jnp.float32)
    w2 = w2.at[dh_i.ravel(), rows.ravel(), cols.ravel()].set(vals.reshape(-1))
    return w2.astype(jnp.bfloat16)


def _build_pool_matrix(W, Cout):
    """(W*Cout, Wo*Cout) f32, averages adjacent Cout-groups (floors odd W)."""
    Wo = W // 2
    P = np.zeros((W * Cout, Wo * Cout), np.float32)
    for wo in range(Wo):
        for c in range(Cout):
            P[(2 * wo) * Cout + c, wo * Cout + c] = 0.5
            P[(2 * wo + 1) * Cout + c, wo * Cout + c] = 0.5
    return jnp.asarray(P)


def conv_block_forward(x_nchw, w_oihw, gamma, beta):
    """Matches ConvBlock.forward (training-mode BN) for NCHW in / NCHW out."""
    N, Cin, H, W = x_nchw.shape
    Cout, _, KH, KW = w_oihw.shape
    ph, pw = KH // 2, KW // 2
    Hp, Wp = H + 2 * ph, W + 2 * pw
    Wo = W // 2
    WC = W * Cout
    WoC = Wo * Cout

    # --- wrapper-side layout plumbing (plain XLA, tiny) -----------------------
    # NCHW -> padded NHWC -> flatten (Wp, Cin) onto the lane axis, cast bf16.
    x_nhwc = jnp.transpose(x_nchw, (0, 2, 3, 1))
    x_pad = jnp.pad(x_nhwc, ((0, 0), (ph, ph), (pw, pw), (0, 0)))
    x_flat = x_pad.astype(jnp.bfloat16).reshape(N, Hp, Wp * Cin)
    w2 = _build_structured_weights(w_oihw, W, Wp)               # (KH, Wp*Cin, WC)
    pool_mat = _build_pool_matrix(W, Cout)                      # (WC, WoC)

    # ---- pass A: conv + partial stats, grid over batch ("parallel"). --------
    conv_flat, sums, sqs = pl.pallas_call(
        functools.partial(conv_stats_kernel, kh=KH, h=H),
        out_shape=(
            jax.ShapeDtypeStruct((N, H, WC), jnp.bfloat16),
            jax.ShapeDtypeStruct((N, 1, WC), jnp.float32),
            jax.ShapeDtypeStruct((N, 1, WC), jnp.float32),
        ),
        grid=(N,),
        in_specs=[
            pl.BlockSpec((1, Hp, Wp * Cin), lambda n: (n, 0, 0)),
            pl.BlockSpec((KH, Wp * Cin, WC), lambda n: (0, 0, 0)),
        ],
        out_specs=(
            pl.BlockSpec((1, H, WC), lambda n: (n, 0, 0)),
            pl.BlockSpec((1, 1, WC), lambda n: (n, 0, 0)),
            pl.BlockSpec((1, 1, WC), lambda n: (n, 0, 0)),
        ),
        compiler_params=pltpu.CompilerParams(
            dimension_semantics=("parallel",),
            vmem_limit_bytes=VMEM_LIMIT),
    )(x_flat, w2)

    # ---- tiny per-channel BN fold (training mode: biased batch variance). ---
    count = float(N * H * W)
    sum_c = jnp.sum(sums.reshape(N, W, Cout), axis=(0, 1))      # (Cout,)
    sq_c = jnp.sum(sqs.reshape(N, W, Cout), axis=(0, 1))
    mean = sum_c / count
    var = jnp.maximum(sq_c / count - mean * mean, 0.0)
    inv = jax.lax.rsqrt(var + BN_EPS)
    scale = gamma.astype(jnp.float32) * inv
    shift = beta.astype(jnp.float32) - mean * scale
    # Tile per-channel values across W so pass B's FMA is a plain lane-wise op.
    scale_lane = jnp.tile(scale, W).reshape(1, WC)
    shift_lane = jnp.tile(shift, W).reshape(1, WC)

    # ---- pass B: BN-apply + leaky_relu + (1,2) avg-pool, grid=(N,). ---------
    out_flat = pl.pallas_call(
        functools.partial(bn_pool_kernel, neg_slope=NEG_SLOPE),
        out_shape=jax.ShapeDtypeStruct((N, H, WoC), jnp.float32),
        grid=(N,),
        in_specs=[
            pl.BlockSpec((1, H, WC), lambda n: (n, 0, 0)),
            pl.BlockSpec((1, WC), lambda n: (0, 0)),
            pl.BlockSpec((1, WC), lambda n: (0, 0)),
            pl.BlockSpec((WC, WoC), lambda n: (0, 0)),
        ],
        out_specs=pl.BlockSpec((1, H, WoC), lambda n: (n, 0, 0)),
        compiler_params=pltpu.CompilerParams(
            dimension_semantics=("parallel",),
            vmem_limit_bytes=VMEM_LIMIT),
    )(conv_flat, scale_lane, shift_lane, pool_mat)

    # back to PyTorch's NCHW convention.
    out_nhwc = out_flat.reshape(N, H, Wo, Cout)
    return jnp.transpose(out_nhwc, (0, 3, 1, 2))


def reference_forward(x_nchw, w_oihw, gamma, beta):
    """Pure-JAX reference (sanity check only)."""
    Cout, _, KH, KW = w_oihw.shape
    ph, pw = KH // 2, KW // 2
    z = jax.lax.conv_general_dilated(
        x_nchw, w_oihw, window_strides=(1, 1),
        padding=[(ph, ph), (pw, pw)],
        dimension_numbers=("NCHW", "OIHW", "NCHW"))
    mean = jnp.mean(z, axis=(0, 2, 3), keepdims=True)
    var = jnp.mean((z - mean) ** 2, axis=(0, 2, 3), keepdims=True)
    y = (z - mean) * jax.lax.rsqrt(var + BN_EPS)
    y = y * gamma.reshape(1, Cout, 1, 1) + beta.reshape(1, Cout, 1, 1)
    y = jnp.where(y >= 0, y, NEG_SLOPE * y)
    N, C, H, W = y.shape
    We = W - (W % 2)
    y = y[:, :, :, :We]
    y = y.reshape(N, C, H, We // 2, 2).mean(axis=-1)
    return y


if __name__ == "__main__":
    # small shapes consistent with the module
    N, Cin, H, W = 2, 4, 16, 16
    Cout, KH, KW = 8, 3, 3

    key = jax.random.PRNGKey(0)
    kx, kw = jax.random.split(key)
    x = jax.random.normal(kx, (N, Cin, H, W), dtype=jnp.float32)

    # deterministic init_layer (Xavier uniform) and init_bn (weight=1, bias=0)
    fan_in = Cin * KH * KW
    fan_out = Cout * KH * KW
    bound = float(np.sqrt(6.0 / (fan_in + fan_out)))
    w = jax.random.uniform(kw, (Cout, Cin, KH, KW), jnp.float32,
                           minval=-bound, maxval=bound)
    gamma = jnp.ones((Cout,), jnp.float32)
    beta = jnp.zeros((Cout,), jnp.float32)

    out = conv_block_forward(x, w, gamma, beta)
    out = jax.block_until_ready(out)

    ref = jax.block_until_ready(reference_forward(x, w, gamma, beta))
    assert out.shape == (N, Cout, H, W // 2), out.shape
    # bf16 conv operands + bf16 conv intermediate vs f32 reference -> looser
    # tolerance than a pure-f32 comparison (consequence of chosen precision).
    assert np.allclose(np.asarray(out), np.asarray(ref), atol=2e-2, rtol=2e-2), (
        "mismatch vs reference")

    print("KERNEL_OK")
</pallas_src>

<mosaic_0001>
module attributes {stable_mosaic.version = 11 : i64} {
  func.func @conv_stats_kernel(%arg0: i32, %arg1: memref<1x18x72xbf16, #tpu.memory_space<vmem>>, %arg2: memref<3x72x128xbf16, #tpu.memory_space<vmem>>, %arg3: memref<1x16x128xbf16, #tpu.memory_space<vmem>>, %arg4: memref<1x1x128xf32, #tpu.memory_space<vmem>>, %arg5: memref<1x1x128xf32, #tpu.memory_space<vmem>>) attributes {dimension_semantics = [#tpu.dimension_semantics<parallel>], iteration_bounds = array<i64: 2>, scalar_prefetch = 0 : i64, scratch_operands = 0 : i64, tpu.core_type = #tpu.core_type<tc>, window_params = [{transform_indices = @transform_0, window_bounds = array<i64: 1, 18, 72>}, {pipeline_mode = #tpu.pipeline_mode<synchronous>, transform_indices = @transform_1, window_bounds = array<i64: 3, 72, 128>}, {transform_indices = @transform_2, window_bounds = array<i64: 1, 16, 128>}, {transform_indices = @transform_3, window_bounds = array<i64: 1, 1, 128>}, {transform_indices = @transform_4, window_bounds = array<i64: 1, 1, 128>}]} {
    %c0 = arith.constant 0 : index
    %c0_0 = arith.constant 0 : index
    %c0_1 = arith.constant 0 : index
    %0 = vector.load %arg1[%c0, %c0_0, %c0_1] : memref<1x18x72xbf16, #tpu.memory_space<vmem>>, vector<1x16x72xbf16>
    %1 = vector.shape_cast %0 : vector<1x16x72xbf16> to vector<16x72xbf16>
    %c0_2 = arith.constant 0 : index
    %c0_3 = arith.constant 0 : index
    %c0_4 = arith.constant 0 : index
    %2 = vector.load %arg2[%c0_2, %c0_3, %c0_4] : memref<3x72x128xbf16, #tpu.memory_space<vmem>>, vector<1x72x128xbf16>
    %3 = vector.shape_cast %2 : vector<1x72x128xbf16> to vector<72x128xbf16>
    %cst = arith.constant dense<0.000000e+00> : vector<16x128xf32>
    %4 = tpu.matmul %1, %3, %cst {dimension_numbers = #tpu.dot_dimension_numbers<[1], [0], [0], [1], [0, 0, 1, 1], [], []>} : vector<16x72xbf16>, vector<72x128xbf16>, vector<16x128xf32> -> vector<16x128xf32>
    %c0_5 = arith.constant 0 : index
    %c1 = arith.constant 1 : index
    %c0_6 = arith.constant 0 : index
    %5 = vector.load %arg1[%c0_5, %c1, %c0_6] : memref<1x18x72xbf16, #tpu.memory_space<vmem>>, vector<1x16x72xbf16>
    %6 = vector.shape_cast %5 : vector<1x16x72xbf16> to vector<16x72xbf16>
    %c1_7 = arith.constant 1 : index
    %c0_8 = arith.constant 0 : index
    %c0_9 = arith.constant 0 : index
    %7 = vector.load %arg2[%c1_7, %c0_8, %c0_9] : memref<3x72x128xbf16, #tpu.memory_space<vmem>>, vector<1x72x128xbf16>
    %8 = vector.shape_cast %7 : vector<1x72x128xbf16> to vector<72x128xbf16>
    %cst_10 = arith.constant dense<0.000000e+00> : vector<16x128xf32>
    %9 = tpu.matmul %6, %8, %cst_10 {dimension_numbers = #tpu.dot_dimension_numbers<[1], [0], [0], [1], [0, 0, 1, 1], [], []>} : vector<16x72xbf16>, vector<72x128xbf16>, vector<16x128xf32> -> vector<16x128xf32>
    %10 = arith.addf %4, %9 : vector<16x128xf32>
    %c0_11 = arith.constant 0 : index
    %c2 = arith.constant 2 : index
    %c0_12 = arith.constant 0 : index
    %11 = vector.load %arg1[%c0_11, %c2, %c0_12] : memref<1x18x72xbf16, #tpu.memory_space<vmem>>, vector<1x16x72xbf16>
    %12 = vector.shape_cast %11 : vector<1x16x72xbf16> to vector<16x72xbf16>
    %c2_13 = arith.constant 2 : index
    %c0_14 = arith.constant 0 : index
    %c0_15 = arith.constant 0 : index
    %13 = vector.load %arg2[%c2_13, %c0_14, %c0_15] : memref<3x72x128xbf16, #tpu.memory_space<vmem>>, vector<1x72x128xbf16>
    %14 = vector.shape_cast %13 : vector<1x72x128xbf16> to vector<72x128xbf16>
    %cst_16 = arith.constant dense<0.000000e+00> : vector<16x128xf32>
    %15 = tpu.matmul %12, %14, %cst_16 {dimension_numbers = #tpu.dot_dimension_numbers<[1], [0], [0], [1], [0, 0, 1, 1], [], []>} : vector<16x72xbf16>, vector<72x128xbf16>, vector<16x128xf32> -> vector<16x128xf32>
    %16 = arith.addf %10, %15 : vector<16x128xf32>
    %17 = arith.truncf %16 : vector<16x128xf32> to vector<16x128xbf16>
    %c0_17 = arith.constant 0 : index
    %c0_18 = arith.constant 0 : index
    %c0_19 = arith.constant 0 : index
    %18 = vector.load %arg3[%c0_17, %c0_18, %c0_19] : memref<1x16x128xbf16, #tpu.memory_space<vmem>>, vector<1x16x128xbf16>
    %19 = vector.shape_cast %18 : vector<1x16x128xbf16> to vector<16x128xbf16>
    %20 = vector.shape_cast %17 : vector<16x128xbf16> to vector<1x16x128xbf16>
    tpu.vector_store %arg3[%c0_17, %c0_18, %c0_19], %20 {strides = array<i32>} : memref<1x16x128xbf16, #tpu.memory_space<vmem>>, vector<1x16x128xbf16>,
    %cst_20 = arith.constant dense<0.000000e+00> : vector<128xf32>
    %21 = vector.multi_reduction <add>, %16, %cst_20 [0] : vector<16x128xf32> to vector<128xf32>
    %22 = vector.shape_cast %21 : vector<128xf32> to vector<1x128xf32>
    %c0_21 = arith.constant 0 : index
    %c0_22 = arith.constant 0 : index
    %c0_23 = arith.constant 0 : index
    %23 = vector.load %arg4[%c0_21, %c0_22, %c0_23] : memref<1x1x128xf32, #tpu.memory_space<vmem>>, vector<1x1x128xf32>
    %24 = vector.shape_cast %23 : vector<1x1x128xf32> to vector<1x128xf32>
    %25 = vector.shape_cast %22 : vector<1x128xf32> to vector<1x1x128xf32>
    tpu.vector_store %arg4[%c0_21, %c0_22, %c0_23], %25 {strides = array<i32>} : memref<1x1x128xf32, #tpu.memory_space<vmem>>, vector<1x1x128xf32>,
    %26 = arith.mulf %16, %16 : vector<16x128xf32>
    %cst_24 = arith.constant dense<0.000000e+00> : vector<128xf32>
    %27 = vector.multi_reduction <add>, %26, %cst_24 [0] : vector<16x128xf32> to vector<128xf32>
    %28 = vector.shape_cast %27 : vector<128xf32> to vector<1x128xf32>
    %c0_25 = arith.constant 0 : index
    %c0_26 = arith.constant 0 : index
    %c0_27 = arith.constant 0 : index
    %29 = vector.load %arg5[%c0_25, %c0_26, %c0_27] : memref<1x1x128xf32, #tpu.memory_space<vmem>>, vector<1x1x128xf32>
    %30 = vector.shape_cast %29 : vector<1x1x128xf32> to vector<1x128xf32>
    %31 = vector.shape_cast %28 : vector<1x128xf32> to vector<1x1x128xf32>
    tpu.vector_store %arg5[%c0_25, %c0_26, %c0_27], %31 {strides = array<i32>} : memref<1x1x128xf32, #tpu.memory_space<vmem>>, vector<1x1x128xf32>,
    return
  }
  func.func @transform_0(%arg0: i32) -> (i32, i32, i32) {
    %c0_i32 = arith.constant 0 : i32
    %c0_i32_0 = arith.constant 0 : i32
    %c0_i32_1 = arith.constant 0 : i32
    return %arg0, %c0_i32, %c0_i32_0 : i32, i32, i32
  }
  func.func @transform_1(%arg0: i32) -> (i32, i32, i32) {
    %c0_i32 = arith.constant 0 : i32
    %c0_i32_0 = arith.constant 0 : i32
    %c0_i32_1 = arith.constant 0 : i32
    %c0_i32_2 = arith.constant 0 : i32
    return %c0_i32, %c0_i32_0, %c0_i32_1 : i32, i32, i32
  }
  func.func @transform_2(%arg0: i32) -> (i32, i32, i32) {
    %c0_i32 = arith.constant 0 : i32
    %c0_i32_0 = arith.constant 0 : i32
    %c0_i32_1 = arith.constant 0 : i32
    return %arg0, %c0_i32, %c0_i32_0 : i32, i32, i32
  }
  func.func @transform_3(%arg0: i32) -> (i32, i32, i32) {
    %c0_i32 = arith.constant 0 : i32
    %c0_i32_0 = arith.constant 0 : i32
    %c0_i32_1 = arith.constant 0 : i32
    return %arg0, %c0_i32, %c0_i32_0 : i32, i32, i32
  }
  func.func @transform_4(%arg0: i32) -> (i32, i32, i32) {
    %c0_i32 = arith.constant 0 : i32
    %c0_i32_0 = arith.constant 0 : i32
    %c0_i32_1 = arith.constant 0 : i32
    return %arg0, %c0_i32, %c0_i32_0 : i32, i32, i32
  }
}

</mosaic_0001>

<llo_original>
// kernel: tpu_custom_call.1
$region0: #{tpu_custom_call.1}
  #allocation0 [shape = 'u32[]', space=smem, size = 0x4, offset = 0x4, fixed_abs, tag = 'smem constant byte address 0x4 - core index']
  #allocation1 [shape = 'u32[144,128]{1,0:T(1,128)}', space=vmem, size = 0x12000, scoped, tag = 'internal scratch']
  %s0 = inlined_call_operand.vmem [shape: bf16[2,18,72], index: 0, kind: input, shape index: {}]
  %s1 = inlined_call_operand.hbm [shape: bf16[3,72,128], index: 1, kind: input, shape index: {}]
  %s2 = inlined_call_operand.hbm [shape: bf16[2,16,128], index: 2, kind: output, shape index: {0}]
  %s3 = inlined_call_operand.hbm [shape: f32[2,1,128], index: 3, kind: output, shape index: {1}]
  %s4 = inlined_call_operand.hbm [shape: f32[2,1,128], index: 4, kind: output, shape index: {2}]
  %5 = xla_tuple %s2, %s3, %s4
  %s6 = sld [smem:[#allocation0]]
  $region61: #{tpu_custom_call.1} parent=0
    _
  %s8 = ssub.s32 1, %s6
  %s9 = scalar_select 0, %s8, %s6
  $region1: #{tpu_custom_call.1} parent=0
    #allocation2 [shape = 'u8[55296]{0}', space=vmem, size = 0xd800, scoped, tag = 'input window, operand 1, single buffered']
    #allocation3 [shape = 's32[2]{0}', space=sflag, size = 0x8, scoped, tag = 'scoped memory for tpu_custom_call.1']
    #allocation4 [shape = 's32[2]{0}', space=sflag, size = 0x8, scoped, tag = 'scoped memory for tpu_custom_call.1']
    #allocation5 [shape = 'u8[8192]{0}', space=vmem, size = 0x2000, scoped, tag = 'output window, operand 0']
    #allocation6 [shape = 'u8[1024]{0}', space=vmem, size = 0x400, scoped, tag = 'output window, operand 1']
    #allocation7 [shape = 's32[2]{0}', space=sflag, size = 0x8, scoped, tag = 'scoped memory for tpu_custom_call.1']
    #allocation8 [shape = 'u8[1024]{0}', space=vmem, size = 0x400, scoped, tag = 'output window, operand 2']
    %10 = vsyncpa [#allocation3], 0
    %11 = vsyncpa [#allocation4], 0
    %s12 = scalar_lea.sflag [#allocation4], 1
    %13 = vsyncpa %s12, 0
    %14 = vsyncpa [#allocation7], 0
    %s15 = scalar_lea.sflag [#allocation7], 1
    %16 = vsyncpa %s15, 0
    loop: start=0, step=1, limit=4
    $region2: #{tpu_custom_call.1} parent=1 // loop_pre_header
      _
    $region3: #{tpu_custom_call.1} parent=1 // loop_header
      %s18 = sphi 0, %s22
      %p19 = scmp.ge.s32.totalorder %s18, 4
      %s28 = sphi 0, %s30
      %s31 = sphi 0, %s28
      %s32 = sphi 0, %s31
      %s48 = sphi 0, %s32
      %s52 = sphi 0, %s52
      %s54 = sphi 0, %s52
      %s55 = sphi 0, %s54
      %s69 = sphi 0, %s55
      %s75 = sphi 0, %s77
      %s78 = sphi 0, %s75
      %s79 = sphi 0, %s78
      %s95 = sphi 0, %s79
      %s101 = sphi 0, %s103
      %s104 = sphi 0, %s101
      %s105 = sphi 0, %s104
      %s121 = sphi 0, %s105
      %s127 = sphi 0, %s129
      %s130 = sphi 0, %s127
      %s131 = sphi 0, %s130
      %s147 = sphi 0, %s131
    $region4: #{tpu_custom_call.1} parent=1 // loop_header_branch
      %21 = sbr.rel (%p19) target = $region8
    $region5: #{tpu_custom_call.1} parent=1 // loop_body
      %s23 = ssub.s32 %s18, 1
      %s24 = ssub.s32 %s18, 2
      %s25 = sadd.s32 %s18, 1
      %s26 = ssub.s32 %s18, %s25
      %p27 = scmp.eq.s32.totalorder %s26, 0
      %s29 = sadd.s32 %s28, 1
      %s30 = scalar_select %p27, %s28, %s29
      %p33 = pneg %p27
      %p34 = scmp.eq.s32.totalorder %s18, 1
      %p35 = por %p33, %p34
      %p36 = scmp.ne.s32.totalorder %s28, %s31
      %p37 = scmp.eq.s32.totalorder %s18, 0
      %p38 = por %p36, %p37
      %p39 = scmp.ne.s32.totalorder %s28, %s31
      %p40 = scmp.eq.s32.totalorder %s23, 1
      %p41 = por %p39, %p40
      %p42 = scmp.ne.s32.totalorder %s31, %s32
      %p43 = scmp.eq.s32.totalorder %s23, 0
      %p44 = por %p42, %p43
      %p45 = scmp.ne.s32.totalorder %s31, %s32
      %p46 = scmp.eq.s32.totalorder %s24, 1
      %p47 = por %p45, %p46
      %p49 = scmp.ne.s32.totalorder %s32, %s48
      %p50 = scmp.eq.s32.totalorder %s24, 0
      %p51 = por %p49, %p50
      %s53 = sadd.s32 %s52, 1
      %p56 = scmp.eq.s32.totalorder %s18, 1
      %p57 = scmp.ne.s32.totalorder %s52, %s54
      %p58 = scmp.eq.s32.totalorder %s18, 0
      %p59 = por %p57, %p58
      %p60 = scmp.ne.s32.totalorder %s52, %s54
      %p61 = scmp.eq.s32.totalorder %s23, 1
      %p62 = por %p60, %p61
      %p63 = scmp.ne.s32.totalorder %s54, %s55
      %p64 = scmp.eq.s32.totalorder %s23, 0
      %p65 = por %p63, %p64
      %p66 = scmp.ne.s32.totalorder %s54, %s55
      %p67 = scmp.eq.s32.totalorder %s24, 1
      %p68 = por %p66, %p67
      %p70 = scmp.ne.s32.totalorder %s55, %s69
      %p71 = scmp.eq.s32.totalorder %s24, 0
      %p72 = por %p70, %p71
      %s73 = ssub.s32 %s18, %s25
      %p74 = scmp.eq.s32.totalorder %s73, 0
      %s76 = sadd.s32 %s75, 1
      %s77 = scalar_select %p74, %s75, %s76
      %p80 = pneg %p74
      %p81 = scmp.eq.s32.totalorder %s18, 1
      %p82 = por %p80, %p81
      %p83 = scmp.ne.s32.totalorder %s75, %s78
      %p84 = scmp.eq.s32.totalorder %s18, 0
      %p85 = por %p83, %p84
      %p86 = scmp.ne.s32.totalorder %s75, %s78
      %p87 = scmp.eq.s32.totalorder %s23, 1
      %p88 = por %p86, %p87
      %p89 = scmp.ne.s32.totalorder %s78, %s79
      %p90 = scmp.eq.s32.totalorder %s23, 0
      %p91 = por %p89, %p90
      %p92 = scmp.ne.s32.totalorder %s78, %s79
      %p93 = scmp.eq.s32.totalorder %s24, 1
      %p94 = por %p92, %p93
      %p96 = scmp.ne.s32.totalorder %s79, %s95
      %p97 = scmp.eq.s32.totalorder %s24, 0
      %p98 = por %p96, %p97
      %s99 = ssub.s32 %s18, %s25
      %p100 = scmp.eq.s32.totalorder %s99, 0
      %s102 = sadd.s32 %s101, 1
      %s103 = scalar_select %p100, %s101, %s102
      %p106 = pneg %p100
      %p107 = scmp.eq.s32.totalorder %s18, 1
      %p108 = por %p106, %p107
      %p109 = scmp.ne.s32.totalorder %s101, %s104
      %p110 = scmp.eq.s32.totalorder %s18, 0
      %p111 = por %p109, %p110
      %p112 = scmp.ne.s32.totalorder %s101, %s104
      %p113 = scmp.eq.s32.totalorder %s23, 1
      %p114 = por %p112, %p113
      %p115 = scmp.ne.s32.totalorder %s104, %s105
      %p116 = scmp.eq.s32.totalorder %s23, 0
      %p117 = por %p115, %p116
      %p118 = scmp.ne.s32.totalorder %s104, %s105
      %p119 = scmp.eq.s32.totalorder %s24, 1
      %p120 = por %p118, %p119
      %p122 = scmp.ne.s32.totalorder %s105, %s121
      %p123 = scmp.eq.s32.totalorder %s24, 0
      %p124 = por %p122, %p123
      %s125 = ssub.s32 %s18, %s25
      %p126 = scmp.eq.s32.totalorder %s125, 0
      %s128 = sadd.s32 %s127, 1
      %s129 = scalar_select %p126, %s127, %s128
      %p132 = pneg %p126
      %p133 = scmp.eq.s32.totalorder %s18, 1
      %p134 = por %p132, %p133
      %p135 = scmp.ne.s32.totalorder %s127, %s130
      %p136 = scmp.eq.s32.totalorder %s18, 0
      %p137 = por %p135, %p136
      %p138 = scmp.ne.s32.totalorder %s127, %s130
      %p139 = scmp.eq.s32.totalorder %s23, 1
      %p140 = por %p138, %p139
      %p141 = scmp.ne.s32.totalorder %s130, %s131
      %p142 = scmp.eq.s32.totalorder %s23, 0
      %p143 = por %p141, %p142
      %p144 = scmp.ne.s32.totalorder %s130, %s131
      %p145 = scmp.eq.s32.totalorder %s24, 1
      %p146 = por %p144, %p145
      %p148 = scmp.ne.s32.totalorder %s131, %s147
      %p149 = scmp.eq.s32.totalorder %s24, 0
      %p150 = por %p148, %p149
      %p151 = scmp.le.s32.totalorder 1, %s18
      %p152 = scmp.lt.s32.totalorder %s18, 3
      %p153 = pnand %p151, %p152
      %p154 = pneg %p153
      // Predicated region
      $region9: #{tpu_custom_call.1} parent=5 // pred_check
        _
      $region10: #{tpu_custom_call.1} parent=5 // pred_check_branch
        %156 = sbr.rel (%p153) target = $region12
      $region11: #{tpu_custom_call.1} parent=5 // pred_region
        %s157 = ssub.s32 %s18, 1
        // Predicated region
        $region13: #{tpu_custom_call.1} parent=11 // pred_check
          %p158 = pneg %p65
        $region14: #{tpu_custom_call.1} parent=11 // pred_check_branch
          %160 = sbr.rel (%p158) target = $region16
        $region15: #{tpu_custom_call.1} parent=11 // pred_region
          %s162 = ssub.s32 1728, 1728
          %163 = vsyncadd [#allocation3], %s162
          %s164 = sshll.u32 [#allocation2], 4
          %s165 = int_to_ptr.vmem [resolvable:$true] %s164
          %170 = dma.hbm_to_vmem [thread:$0]  %s1, 1728, %s165, [#allocation3], 64, 64, 4
        $region16: #{tpu_custom_call.1} parent=11 // pred_fallthru
          _
      $region12: #{tpu_custom_call.1} parent=5 // pred_fallthru
        _
      %p171 = scmp.lt.s32.totalorder %s18, 2
      // Predicated region
      $region17: #{tpu_custom_call.1} parent=5 // pred_check
        %p172 = pneg %p171
      $region18: #{tpu_custom_call.1} parent=5 // pred_check_branch
        %174 = sbr.rel (%p172) target = $region20
      $region19: #{tpu_custom_call.1} parent=5 // pred_region
        // Predicated region
        $region21: #{tpu_custom_call.1} parent=19 // pred_check
          %p175 = pneg %p38
        $region22: #{tpu_custom_call.1} parent=19 // pred_check_branch
          %177 = sbr.rel (%p175) target = $region24
        $region23: #{tpu_custom_call.1} parent=19 // pred_region
          %p178 = scmp.lt.s32.totalorder %s18, 1
          %s179 = scalar_select %p178, %s18, 1
          %s180 = smul.addr %s179, 3
          %s181 = smul.addr %s180, 4
          %s182 = scalar_lea.vmem %s0, %s181
        $region24: #{tpu_custom_call.1} parent=19 // pred_fallthru
          _
      $region20: #{tpu_custom_call.1} parent=5 // pred_fallthru
        _
      %p183 = scmp.le.s32.totalorder 1, %s18
      %p184 = scmp.lt.s32.totalorder %s18, 3
      %p185 = pnand %p183, %p184
      %p186 = pneg %p185
      // Predicated region
      $region25: #{tpu_custom_call.1} parent=5 // pred_check
        _
      $region26: #{tpu_custom_call.1} parent=5 // pred_check_branch
        %188 = sbr.rel (%p185) target = $region28
      $region27: #{tpu_custom_call.1} parent=5 // pred_region
        %s189 = ssub.s32 %s18, 1
        // Predicated region
        $region29: #{tpu_custom_call.1} parent=27 // pred_check
          %p190 = pneg %p65
        $region30: #{tpu_custom_call.1} parent=27 // pred_check_branch
          %192 = sbr.rel (%p190) target = $region32
        $region31: #{tpu_custom_call.1} parent=27 // pred_region
          %193 = dma.done [#allocation3], 1728
        $region32: #{tpu_custom_call.1} parent=27 // pred_fallthru
          _
        %p194 = scmp.lt.s32.totalorder %s23, 1
        %s195 = scalar_select %p194, %s23, 1
        %s196 = smul.addr %s195, 3
        %s197 = smul.addr %s196, 4
        %s198 = scalar_lea.vmem %s0, %s197
        %p199 = pneg %p44
        %p200 = pneg %p41
        %p201 = pneg %p65
        %p202 = pneg %p62
        %p203 = pneg %p91
        %p204 = pneg %p88
        %s205 = sand.u32 %s78, 1
        %s206 = scalar_lea.sflag [#allocation4], %s205
        %s207 = sand.u32 %s78, 1
        %s208 = smul.addr %s207, 8
        %s209 = scalar_lea.vmem [#allocation5], %s208
        %p210 = pneg %p117
        %p211 = pneg %p114
        %s212 = sand.u32 %s23, 1
        %s213 = scalar_lea.sflag [#allocation7], %s212
        %s214 = sand.u32 %s104, 1
        %s215 = scalar_lea.vmem [#allocation6], %s214
        %p216 = pneg %p143
        %p217 = pneg %p140
        %s218 = sand.u32 %s23, 1
        %s219 = scalar_lea.sflag [#allocation7], %s218
        %s220 = sand.u32 %s130, 1
        %s221 = scalar_lea.vmem [#allocation8], %s220
        %p222 = scmp.lt.s32.totalorder %s23, 1
        %s223 = scalar_select %p222, %s23, 1
        %s224 = smul.addr %s223, 3
        %s225 = smul.addr %s224, 4
        %s226 = scalar_lea.vmem %s0, %s225
        %v228 = vld [vmem:[%s226] sm:$0xf]
        %v229 = vld [vmem:[%s226 + $0x4] sm:$0xf]
        %v230 = vld [vmem:[#allocation2] sm:$0xf]
        %v231 = vld [vmem:[#allocation2 + $0x4] sm:$0xf]
        %v232 = vld [vmem:[#allocation2 + $0x8] sm:$0xf]
        %v233 = vld [vmem:[#allocation2 + $0xc] sm:$0xf]
        %v234 = vld [vmem:[#allocation2 + $0x10] sm:$0xf]
        %v235 = vld [vmem:[#allocation2 + $0x14] sm:$0xf]
        %v236 = vld [vmem:[#allocation2 + $0x18] sm:$0xf]
        %v237 = vld [vmem:[#allocation2 + $0x1c] sm:$0xf]
        %v238 = vld [vmem:[#allocation2 + $0x20] sm:$0xf]
        %v239 = vld [vmem:[%s226 + $0x8] sm:$0x1]
        %s240 = scalar_lea.vmem [#allocation2], 36
        %v241 = vld [vmem:[%s240] sm:$0xf]
        %v242 = vld [vmem:[%s240 + $0x4] sm:$0xf]
        %v243 = vld [vmem:[%s240 + $0x8] sm:$0xf]
        %v244 = vld [vmem:[%s240 + $0xc] sm:$0xf]
        %v245 = vld [vmem:[%s240 + $0x10] sm:$0xf]
        %v246 = vld [vmem:[%s240 + $0x14] sm:$0xf]
        %v247 = vld [vmem:[%s240 + $0x18] sm:$0xf]
        %v248 = vld [vmem:[%s240 + $0x1c] sm:$0xf]
        %v249 = vld [vmem:[%s240 + $0x20] sm:$0xf]
        %v253 = vunpack.c.l.b16 %v228
        %v254 = vunpack.c.l.b16 %v229
        %v255 = vunpack.c.l.b16 %v239
        %v256 = vpack.c.b16 %v254, %v253
        %v257 = vpack.c.b16 %v255, %v255
        %vm258 = vsmask.f32 7424
        %v260 = vshrl.u32 %v256, 16
        %v262 = vshll.u32 %v256, 16
        %v264 = vrot.slane %v262, 1
        %v265 = vor.u32 %v260, %v264
        %v267 = vshll.u32 %v257, 16
        %v269 = vrot.slane %v267, 1
        %v270 = vsel %vm258, %v265, %v269
        %v280 = vunpack.c.l.b16 %v241
        %v281 = vunpack.c.l.b16 %v242
        %v282 = vunpack.c.l.b16 %v243
        %v283 = vunpack.c.l.b16 %v244
        %v284 = vunpack.c.l.b16 %v245
        %v285 = vunpack.c.l.b16 %v246
        %v286 = vunpack.c.l.b16 %v247
        %v287 = vunpack.c.l.b16 %v248
        %v288 = vunpack.c.l.b16 %v249
        %v289 = vpack.c.b16 %v281, %v280
        %v290 = vpack.c.b16 %v283, %v282
        %v291 = vpack.c.b16 %v285, %v284
        %v292 = vpack.c.b16 %v287, %v286
        %v293 = vpack.c.b16 %v288, %v288
        %vm298 = vcmask 588800
        %v300 = vsel %vm298, %v270, 0
        %vm302 = vcmask 1043456
        %v304 = vsel %vm302, %v293, 0
        %306 = vmatprep.subr.bf16.mxu0 0
        %307 = vmatpush1.bf16.msra.mxu0 %v289
        %308 = vmatprep.subr.bf16.mxu0 0
        %309 = vmatpush1.bf16.msra.mxu0 %v290
        %310 = vmatprep.subr.bf16.mxu0 0
        %311 = vmatpush1.bf16.msra.mxu0 %v291
        %312 = vmatprep.subr.bf16.mxu0 0
        %313 = vmatpush1.bf16.msra.mxu0 %v292
        %314 = vmatprep.subr.bf16.mxu0 0
        %315 = vmatpush1.bf16.msra.mxu0 %v304
        %316 = vmatprep.subr.bf16.mxu0 0
        %317 = vmatpush1.bf16.msra.mxu0 0
        %318 = vmatprep.subr.bf16.mxu0 0
        %319 = vmatpush1.bf16.msra.mxu0 0
        %320 = vmatprep.subr.bf16.mxu0 0
        %321 = vmatpush1.bf16.msra.mxu0 0
        %322 = vmatprep.subr.bf16.mxu0 0
        %323 = vmatpush1.bf16.msra.mxu0 0
        %324 = vmatprep.subr.bf16.mxu0 0
        %325 = vmatpush1.bf16.msra.mxu0 0
        %326 = vmatprep.subr.bf16.mxu0 0
        %327 = vmatpush1.bf16.msra.mxu0 0
        %328 = vmatprep.subr.bf16.mxu0 0
        %329 = vmatpush1.bf16.msra.mxu0 0
        %330 = vmatprep.subr.bf16.mxu0 0
        %331 = vmatpush1.bf16.msra.mxu0 0
        %332 = vmatprep.subr.bf16.mxu0 0
        %333 = vmatpush1.bf16.msra.mxu0 0
        %334 = vmatprep.subr.bf16.mxu0 0
        %335 = vmatpush1.bf16.msra.mxu0 0
        %336 = vmatprep.subr.bf16.mxu0 0
        %337 = vmatpush1.bf16.msra.mxu0 0
        %338 = vmatprep.mubr.bf16.mxu0 0
        %339 = vmatmul.mubr.bf16.gmra.mrb[0].mxu0 %v300
        %v340 = vpop.f32.mrb[0].mxu0
        %v341 = vadd.f32 0.0, %v340
        %v342 = vpop.f32.mrb[0].mxu0
        %v343 = vpop.f32.mrb[0].mxu0
        %v344 = vadd.f32 0.0, %v343
        %v345 = vpop.f32.mrb[0].mxu0
        %346 = vdwg.mxu0
        %v356 = vunpack.c.l.b16 %v230
        %v357 = vunpack.c.l.b16 %v231
        %v358 = vunpack.c.l.b16 %v232
        %v359 = vunpack.c.l.b16 %v233
        %v360 = vunpack.c.l.b16 %v234
        %v361 = vunpack.c.l.b16 %v235
        %v362 = vunpack.c.l.b16 %v236
        %v363 = vunpack.c.l.b16 %v237
        %v364 = vunpack.c.l.b16 %v238
        %v365 = vpack.c.b16 %v357, %v356
        %v366 = vpack.c.b16 %v359, %v358
        %v367 = vpack.c.b16 %v361, %v360
        %v368 = vpack.c.b16 %v363, %v362
        %v369 = vpack.c.b16 %v364, %v364
        %v374 = vsel %vm298, %v256, 0
        %v377 = vsel %vm302, %v369, 0
        %379 = vmatprep.subr.bf16.mxu0 0
        %380 = vmatpush1.bf16.msra.mxu0 %v365
        %381 = vmatprep.subr.bf16.mxu0 0
        %382 = vmatpush1.bf16.msra.mxu0 %v366
        %383 = vmatprep.subr.bf16.mxu0 0
        %384 = vmatpush1.bf16.msra.mxu0 %v367
        %385 = vmatprep.subr.bf16.mxu0 0
        %386 = vmatpush1.bf16.msra.mxu0 %v368
        %387 = vmatprep.subr.bf16.mxu0 0
        %388 = vmatpush1.bf16.msra.mxu0 %v377
        %389 = vmatprep.subr.bf16.mxu0 0
        %390 = vmatpush1.bf16.msra.mxu0 0
        %391 = vmatprep.subr.bf16.mxu0 0
        %392 = vmatpush1.bf16.msra.mxu0 0
        %393 = vmatprep.subr.bf16.mxu0 0
        %394 = vmatpush1.bf16.msra.mxu0 0
        %395 = vmatprep.subr.bf16.mxu0 0
        %396 = vmatpush1.bf16.msra.mxu0 0
        %397 = vmatprep.subr.bf16.mxu0 0
        %398 = vmatpush1.bf16.msra.mxu0 0
        %399 = vmatprep.subr.bf16.mxu0 0
        %400 = vmatpush1.bf16.msra.mxu0 0
        %401 = vmatprep.subr.bf16.mxu0 0
        %402 = vmatpush1.bf16.msra.mxu0 0
        %403 = vmatprep.subr.bf16.mxu0 0
        %404 = vmatpush1.bf16.msra.mxu0 0
        %405 = vmatprep.subr.bf16.mxu0 0
        %406 = vmatpush1.bf16.msra.mxu0 0
        %407 = vmatprep.subr.bf16.mxu0 0
        %408 = vmatpush1.bf16.msra.mxu0 0
        %409 = vmatprep.subr.bf16.mxu0 0
        %410 = vmatpush1.bf16.msra.mxu0 0
        %411 = vmatprep.mubr.bf16.mxu0 0
        %412 = vmatmul.mubr.bf16.gmra.mrb[0].mxu0 %v374
        %v413 = vpop.f32.mrb[0].mxu0
        %v414 = vadd.f32 %v341, %v413
        %v415 = vpop.f32.mrb[0].mxu0
        %v416 = vpop.f32.mrb[0].mxu0
        %v417 = vadd.f32 %v344, %v416
        %v418 = vpop.f32.mrb[0].mxu0
        %419 = vdwg.mxu0
        %v420 = vld [vmem:[%s226] sm:$0xe]
        %s421 = scalar_lea.vmem [#allocation2], 72
        %v422 = vld [vmem:[%s421] sm:$0xf]
        %v423 = vld [vmem:[%s421 + $0x4] sm:$0xf]
        %v424 = vld [vmem:[%s421 + $0x8] sm:$0xf]
        %v425 = vld [vmem:[%s421 + $0xc] sm:$0xf]
        %v426 = vld [vmem:[%s421 + $0x10] sm:$0xf]
        %v427 = vld [vmem:[%s421 + $0x14] sm:$0xf]
        %v428 = vld [vmem:[%s421 + $0x18] sm:$0xf]
        %v429 = vld [vmem:[%s421 + $0x1c] sm:$0xf]
        %v430 = vld [vmem:[%s421 + $0x20] sm:$0xf]
        %v432 = vunpack.c.l.b16 %v420
        %v433 = vpack.c.b16 %v254, %v432
        %vm434 = vcmask 1046528
        %v435 = vrot.slane %v433, 1
        %v436 = vrot.slane %v257, 1
        %v437 = vsel %vm434, %v435, %v436
        %v447 = vunpack.c.l.b16 %v422
        %v448 = vunpack.c.l.b16 %v423
        %v449 = vunpack.c.l.b16 %v424
        %v450 = vunpack.c.l.b16 %v425
        %v451 = vunpack.c.l.b16 %v426
        %v452 = vunpack.c.l.b16 %v427
        %v453 = vunpack.c.l.b16 %v428
        %v454 = vunpack.c.l.b16 %v429
        %v455 = vunpack.c.l.b16 %v430
        %v456 = vpack.c.b16 %v448, %v447
        %v457 = vpack.c.b16 %v450, %v449
        %v458 = vpack.c.b16 %v452, %v451
        %v459 = vpack.c.b16 %v454, %v453
        %v460 = vpack.c.b16 %v455, %v455
        %v466 = vsel %vm298, %v437, 0
        %v469 = vsel %vm302, %v460, 0
        %471 = vmatprep.subr.bf16.mxu0 0
        %472 = vmatpush1.bf16.msra.mxu0 %v456
        %473 = vmatprep.subr.bf16.mxu0 0
        %474 = vmatpush1.bf16.msra.mxu0 %v457
        %475 = vmatprep.subr.bf16.mxu0 0
        %476 = vmatpush1.bf16.msra.mxu0 %v458
        %477 = vmatprep.subr.bf16.mxu0 0
        %478 = vmatpush1.bf16.msra.mxu0 %v459
        %479 = vmatprep.subr.bf16.mxu0 0
        %480 = vmatpush1.bf16.msra.mxu0 %v469
        %481 = vmatprep.subr.bf16.mxu0 0
        %482 = vmatpush1.bf16.msra.mxu0 0
        %483 = vmatprep.subr.bf16.mxu0 0
        %484 = vmatpush1.bf16.msra.mxu0 0
        %485 = vmatprep.subr.bf16.mxu0 0
        %486 = vmatpush1.bf16.msra.mxu0 0
        %487 = vmatprep.subr.bf16.mxu0 0
        %488 = vmatpush1.bf16.msra.mxu0 0
        %489 = vmatprep.subr.bf16.mxu0 0
        %490 = vmatpush1.bf16.msra.mxu0 0
        %491 = vmatprep.subr.bf16.mxu0 0
        %492 = vmatpush1.bf16.msra.mxu0 0
        %493 = vmatprep.subr.bf16.mxu0 0
        %494 = vmatpush1.bf16.msra.mxu0 0
        %495 = vmatprep.subr.bf16.mxu0 0
        %496 = vmatpush1.bf16.msra.mxu0 0
        %497 = vmatprep.subr.bf16.mxu0 0
        %498 = vmatpush1.bf16.msra.mxu0 0
        %499 = vmatprep.subr.bf16.mxu0 0
        %500 = vmatpush1.bf16.msra.mxu0 0
        %501 = vmatprep.subr.bf16.mxu0 0
        %502 = vmatpush1.bf16.msra.mxu0 0
        %503 = vmatprep.mubr.bf16.mxu0 0
        %504 = vmatmul.mubr.bf16.gmra.mrb[0].mxu0 %v466
        %v505 = vpop.f32.mrb[0].mxu0
        %v506 = vadd.f32 0.0, %v505
        %v507 = vpop.f32.mrb[0].mxu0
        %v508 = vpop.f32.mrb[0].mxu0
        %v509 = vadd.f32 0.0, %v508
        %v510 = vpop.f32.mrb[0].mxu0
        %511 = vdwg.mxu0
        %v512 = vadd.f32 %v414, %v506
        %v513 = vadd.f32 %v417, %v509
        %v514 = vpack.c.bf16 %v513, %v512
        %v516 = vunpack.c.l.b16 %v514
        %v517 = vunpack.c.h.b16 %v514
        %v518 = vpack.c.b16 %v516, %v516
        %v519 = vpack.c.b16 %v517, %v517
        %522 = vst [vmem:[%s209] sm:$0xf] %v518
        %523 = vst [vmem:[%s209 + $0x4] sm:$0xf] %v519
        %v524 = vadd.f32 %v512, %v513
        %v525 = vrot.slane %v524, 4
        %v526 = vadd.f32 %v524, %v525
        %v527 = vrot.slane %v526, 2
        %v528 = vadd.f32 %v526, %v527
        %v529 = vrot.slane %v528, 1
        %v530 = vadd.f32 %v528, %v529
        %531 = vst [vmem:[%s215] sm:$0x1] %v530
        %v532 = vmul.f32 %v512, %v512
        %v533 = vmul.f32 %v513, %v513
        %v534 = vadd.f32 %v532, %v533
        %v535 = vrot.slane %v534, 4
        %v536 = vadd.f32 %v534, %v535
        %v537 = vrot.slane %v536, 2
        %v538 = vadd.f32 %v536, %v537
        %v539 = vrot.slane %v538, 1
        %v540 = vadd.f32 %v538, %v539
        %541 = vst [vmem:[%s221] sm:$0x1] %v540
        %s542 = sand.u32 %s78, 1
        %s543 = scalar_lea.sflag [#allocation4], %s542
        %s544 = sand.u32 %s78, 1
        %s545 = smul.addr %s544, 8
        %s546 = scalar_lea.vmem [#allocation5], %s545
        %s547 = sand.u32 %s23, 1
        %s548 = scalar_lea.sflag [#allocation7], %s547
        %s549 = sand.u32 %s104, 1
        %s550 = scalar_lea.vmem [#allocation6], %s549
        %s551 = sand.u32 %s23, 1
        %s552 = scalar_lea.sflag [#allocation7], %s551
        %s553 = sand.u32 %s130, 1
        %s554 = scalar_lea.vmem [#allocation8], %s553
        // Predicated region
        $region33: #{tpu_custom_call.1} parent=27 // pred_check
          %p555 = pneg %p88
        $region34: #{tpu_custom_call.1} parent=27 // pred_check_branch
          %557 = sbr.rel (%p555) target = $region36
        $region35: #{tpu_custom_call.1} parent=27 // pred_region
          %s559 = ssub.s32 128, 128
          %560 = vsyncadd %s543, %s559
          %s561 = smul.addr %s23, 2
          %s562 = smul.addr %s561, 64
          %s563 = scalar_lea.hbm %s2, %s562
          %s564 = sshll.u32 %s546, 4
          %s565 = int_to_ptr.vmem [resolvable:$true] %s564
          %570 = dma.vmem_to_hbm [thread:$0]  %s565, 128, %s563, %s543, 64, 64, 4
        $region36: #{tpu_custom_call.1} parent=27 // pred_fallthru
          _
        // Predicated region
        $region37: #{tpu_custom_call.1} parent=27 // pred_check
          %p571 = pneg %p114
        $region38: #{tpu_custom_call.1} parent=27 // pred_check_branch
          %573 = sbr.rel (%p571) target = $region40
        $region39: #{tpu_custom_call.1} parent=27 // pred_region
          %s575 = ssub.s32 16, 16
          %576 = vsyncadd %s548, %s575
          %s577 = smul.addr %s23, 16
          %s578 = scalar_lea.hbm %s3, %s577
          %s580 = sshll.u32 %s550, 4
          %s581 = int_to_ptr.vmem [resolvable:$true] %s580
          %583 = dma.vmem_to_hbm [thread:$0]  %s581, 16, %s578, %s548
        $region40: #{tpu_custom_call.1} parent=27 // pred_fallthru
          _
        // Predicated region
        $region41: #{tpu_custom_call.1} parent=27 // pred_check
          %p584 = pneg %p140
        $region42: #{tpu_custom_call.1} parent=27 // pred_check_branch
          %586 = sbr.rel (%p584) target = $region44
        $region43: #{tpu_custom_call.1} parent=27 // pred_region
          %s588 = ssub.s32 16, 16
          %589 = vsyncadd %s552, %s588
          %s590 = smul.addr %s23, 16
          %s591 = scalar_lea.hbm %s4, %s590
          %s593 = sshll.u32 %s554, 4
          %s594 = int_to_ptr.vmem [resolvable:$true] %s593
          %596 = dma.vmem_to_hbm [thread:$0]  %s594, 16, %s591, %s552
        $region44: #{tpu_custom_call.1} parent=27 // pred_fallthru
          _
      $region28: #{tpu_custom_call.1} parent=5 // pred_fallthru
        _
      %p597 = scmp.le.s32.totalorder 2, %s18
      // Predicated region
      $region45: #{tpu_custom_call.1} parent=5 // pred_check
        %p598 = pneg %p597
      $region46: #{tpu_custom_call.1} parent=5 // pred_check_branch
        %600 = sbr.rel (%p598) target = $region48
      $region47: #{tpu_custom_call.1} parent=5 // pred_region
        %s601 = ssub.s32 %s18, 2
        // Predicated region
        $region49: #{tpu_custom_call.1} parent=47 // pred_check
          %p602 = pneg %p94
        $region50: #{tpu_custom_call.1} parent=47 // pred_check_branch
          %604 = sbr.rel (%p602) target = $region52
        $region51: #{tpu_custom_call.1} parent=47 // pred_region
          %s605 = sand.u32 %s79, 1
          %s606 = scalar_lea.sflag [#allocation4], %s605
          %s607 = sand.u32 %s79, 1
          %s608 = smul.addr %s607, 8
          %s609 = scalar_lea.vmem [#allocation5], %s608
          %610 = dma.done %s606, 128
        $region52: #{tpu_custom_call.1} parent=47 // pred_fallthru
          _
        // Predicated region
        $region53: #{tpu_custom_call.1} parent=47 // pred_check
          %p611 = pneg %p120
        $region54: #{tpu_custom_call.1} parent=47 // pred_check_branch
          %613 = sbr.rel (%p611) target = $region56
        $region55: #{tpu_custom_call.1} parent=47 // pred_region
          %s614 = sand.u32 %s24, 1
          %s615 = scalar_lea.sflag [#allocation7], %s614
          %s616 = sand.u32 %s105, 1
          %s617 = scalar_lea.vmem [#allocation6], %s616
          %618 = dma.done %s615, 16
        $region56: #{tpu_custom_call.1} parent=47 // pred_fallthru
          _
        // Predicated region
        $region57: #{tpu_custom_call.1} parent=47 // pred_check
          %p619 = pneg %p146
        $region58: #{tpu_custom_call.1} parent=47 // pred_check_branch
          %621 = sbr.rel (%p619) target = $region60
        $region59: #{tpu_custom_call.1} parent=47 // pred_region
          %s622 = sand.u32 %s24, 1
          %s623 = scalar_lea.sflag [#allocation7], %s622
          %s624 = sand.u32 %s131, 1
          %s625 = scalar_lea.vmem [#allocation8], %s624
          %626 = dma.done %s623, 16
        $region60: #{tpu_custom_call.1} parent=47 // pred_fallthru
          _
      $region48: #{tpu_custom_call.1} parent=5 // pred_fallthru
        _
    $region6: #{tpu_custom_call.1} parent=1 // loop_footer
      %s22 = sadd.s32 1, %s18
    $region7: #{tpu_custom_call.1} parent=1 // loop_footer_branch
      %17 = sbr.rel target = $region3
    $region8: #{tpu_custom_call.1} parent=1 // loop_exit
      _
    %627 = vsyncpa [#allocation3], 1
    %s628 = scalar_lea.sflag [#allocation3], 1
    %629 = vsyncpa %s628, 1
    %630 = vsyncpa [#allocation4], 1
    %s631 = scalar_lea.sflag [#allocation4], 1
    %632 = vsyncpa %s631, 1
    %633 = vsyncpa [#allocation7], 1
    %s634 = scalar_lea.sflag [#allocation7], 1
    %635 = vsyncpa %s634, 1

</llo_original>
